<compile_context>
chip_gen: v5e
topology: v5e:2x2
jax: 0.10.0
libtpu: 0.0.40
codegen_flags: <defaults>
</compile_context>

<pallas_src>
import functools
import math

import numpy as np
import jax
import jax.numpy as jnp
from jax.experimental import pallas as pl
from jax.experimental.pallas import tpu as pltpu

LN_EPS = 1e-5  # matches torch.nn.LayerNorm default


def _patch_expand_kernel(x_ref, w_ref, b_ref, g_ref, beta_ref, p_ref, q_ref, o_ref):
    # x_ref:    (tm, Cin_row)       voxel rows (r voxels packed per row)
    # w_ref:    (Cin_row, L_row)    packed weights, lane order (j, kx, ky, kz, co)
    # b_ref:    (1, L_row)          conv bias, tiled over groups (f32)
    # g_ref:    (1, L_row)          LayerNorm gamma, tiled (f32)
    # beta_ref: (1, L_row)          LayerNorm beta, tiled (f32)
    # p_ref:    (L_row, G)          group-averaging matrix, 1/C_out per group (f32)
    # q_ref:    (G, L_row)          group-broadcast matrix, ones per group (f32)
    # o_ref:    (tm, L_row)
    x = x_ref[...]
    w = w_ref[...]
    p = p_ref[...]
    q = q_ref[...]

    # Non-overlapping ConvTranspose3d == one matmul over C_in (f32 accumulate).
    y = jnp.dot(x, w, preferred_element_type=jnp.float32) + b_ref[...]

    # LayerNorm over each contiguous C_out lane group via factored reduction:
    # group means (tm,L)@(L,G), then broadcast back (tm,G)@(G,L) on the MXU.
    mean = jnp.dot(jnp.dot(y, p, preferred_element_type=jnp.float32), q,
                   preferred_element_type=jnp.float32)
    d = y - mean
    var = jnp.dot(jnp.dot(d * d, p, preferred_element_type=jnp.float32), q,
                  preferred_element_type=jnp.float32)
    yn = d * jax.lax.rsqrt(var + LN_EPS)

    o_ref[...] = (yn * g_ref[...] + beta_ref[...]).astype(o_ref.dtype)


@functools.partial(
    jax.jit,
    static_argnames=("up_scaling_factor", "compute_dtype", "out_dtype", "tm_max"),
)
def patch_expanding_3d(x, weight, bias, gamma, beta, *, up_scaling_factor,
                       compute_dtype=jnp.bfloat16, out_dtype=None, tm_max=4096):
    """x: [B, C_in, X, Y, Z] (NCDHW, matching PyTorch).

    weight: [C_in, C_out, s, s, s]  (PyTorch ConvTranspose3d layout)
    bias, gamma, beta: [C_out]
    Returns [B, C_out, X*s, Y*s, Z*s] in `out_dtype` (defaults to x.dtype).
    """
    s = up_scaling_factor
    B, C_in, X, Y, Z = x.shape
    C_out = weight.shape[1]
    s3 = s * s * s
    L = s3 * C_out
    N = B * X * Y * Z
    if out_dtype is None:
        out_dtype = x.dtype
    f32 = jnp.float32

    # Pack r consecutive voxels per kernel row so the output lane width r*L is
    # a multiple of 128 when L itself is narrow (lane-dense, unmasked stores).
    r = 1
    if L < 128:
        cand = 128 // math.gcd(L, 128)
        if N % cand == 0:
            r = cand
    n_rows = N // r
    cin_row = r * C_in
    l_row = r * L
    G = r * s3  # number of LayerNorm groups (each of size C_out) per packed row

    # ---- operand packing (XLA side) -------------------------------------
    # TODO(synk): fuse this NCDHW -> (rows, C_in) flatten into the kernel with a
    # native-layout BlockSpec + in-kernel transpose (XLU slot is idle) to save
    # one HBM pass over x.
    x_rows = (jnp.transpose(x, (0, 2, 3, 4, 1))
              .reshape(N, C_in)
              .astype(compute_dtype)
              .reshape(n_rows, cin_row))   # free reinterpretation (row-major)

    # W2[ci, ((kx*s+ky)*s+kz)*C_out + co] = weight[ci, co, kx, ky, kz]
    w2 = jnp.transpose(weight, (0, 2, 3, 4, 1)).reshape(C_in, L).astype(compute_dtype)
    w_row = jnp.kron(jnp.eye(r, dtype=w2.dtype), w2) if r > 1 else w2  # block-diag

    bias_row = jnp.tile(bias.astype(f32), G).reshape(1, l_row)
    gamma_row = jnp.tile(gamma.astype(f32), G).reshape(1, l_row)
    beta_row = jnp.tile(beta.astype(f32), G).reshape(1, l_row)

    # Factored group-mean matrices (replace the dense L x L averaging matrix).
    p_mat = jnp.kron(jnp.eye(G, dtype=f32), jnp.full((C_out, 1), 1.0 / C_out, f32))
    q_mat = jnp.kron(jnp.eye(G, dtype=f32), jnp.ones((1, C_out), f32))

    # ---- row-tile selection (VMEM- and megacore-aware) -------------------
    in_b = np.dtype(compute_dtype).itemsize
    out_b = np.dtype(out_dtype).itemsize
    # double-buffered x & out blocks + ~6 f32 (tm, l_row) kernel temporaries
    per_row = 2 * cin_row * in_b + 2 * l_row * out_b + 6 * l_row * 4
    budget = 28 * 1024 * 1024
    tm = min(tm_max, max(8, budget // per_row), n_rows)
    if tm < n_rows:
        tm = max(8, (tm // 8) * 8)          # keep sublane dim a multiple of 8
    elif n_rows >= 16:
        # Split a 1-step grid into 2 so the "parallel" axis can be sharded
        # across v7x's two TensorCores.
        tm = min(n_rows, ((-(-n_rows // 2)) + 7) // 8 * 8)
    grid = (pl.cdiv(n_rows, tm),)

    # TODO(synk): if profiling at large tm shows exposed input DMA, add
    # pipeline_mode=pl.Buffered(3) on the x in_spec only.
    out2d = pl.pallas_call(
        _patch_expand_kernel,
        out_shape=jax.ShapeDtypeStruct((n_rows, l_row), out_dtype),
        grid=grid,
        in_specs=[
            pl.BlockSpec((tm, cin_row), lambda i: (i, 0)),
            pl.BlockSpec((cin_row, l_row), lambda i: (0, 0)),  # resident
            pl.BlockSpec((1, l_row), lambda i: (0, 0)),        # resident
            pl.BlockSpec((1, l_row), lambda i: (0, 0)),        # resident
            pl.BlockSpec((1, l_row), lambda i: (0, 0)),        # resident
            pl.BlockSpec((l_row, G), lambda i: (0, 0)),        # resident
            pl.BlockSpec((G, l_row), lambda i: (0, 0)),        # resident
        ],
        out_specs=pl.BlockSpec((tm, l_row), lambda i: (i, 0)),
        compiler_params=pltpu.CompilerParams(
            dimension_semantics=("parallel",),
            vmem_limit_bytes=48 * 1024 * 1024,
        ),
    )(x_rows, w_row, bias_row, gamma_row, beta_row, p_mat, q_mat)

    # (n_rows, r*L) is byte-identical to (N, L); un-interleave to NCDHW.
    # TODO(synk): with a channels-last output contract this whole block goes away.
    out = out2d.reshape(B, X, Y, Z, s, s, s, C_out)
    out = jnp.transpose(out, (0, 7, 1, 4, 2, 5, 3, 6))  # (b, co, x, kx, y, ky, z, kz)
    return out.reshape(B, C_out, X * s, Y * s, Z * s)


def _reference(x, weight, bias, gamma, beta, s):
    """Pure-JAX reference: ConvTranspose3d(k=s, stride=s, pad=0) + channel LayerNorm."""
    B, C_in, X, Y, Z = x.shape
    C_out = weight.shape[1]
    y = jnp.einsum("bcxyz,coijk->bxiyjzko", x, weight) + bias
    mean = jnp.mean(y, axis=-1, keepdims=True)
    var = jnp.mean(jnp.square(y - mean), axis=-1, keepdims=True)
    yn = (y - mean) * jax.lax.rsqrt(var + LN_EPS)
    yn = yn * gamma + beta
    yn = yn.reshape(B, X * s, Y * s, Z * s, C_out)
    return jnp.transpose(yn, (0, 4, 1, 2, 3))


if __name__ == "__main__":
    key = jax.random.PRNGKey(0)
    k1, k2, k3, k4, k5 = jax.random.split(key, 5)

    # PatchExpanding3D(in_dim=16, out_dim=8, up_scaling_factor=2)
    B, C_in, C_out, s = 2, 16, 8, 2
    X = Y = Z = 4

    x = jax.random.normal(k1, (B, C_in, X, Y, Z), dtype=jnp.float32)
    weight = 0.1 * jax.random.normal(k2, (C_in, C_out, s, s, s), dtype=jnp.float32)
    bias = 0.1 * jax.random.normal(k3, (C_out,), dtype=jnp.float32)
    gamma = 1.0 + 0.05 * jax.random.normal(k4, (C_out,), dtype=jnp.float32)
    beta = 0.05 * jax.random.normal(k5, (C_out,), dtype=jnp.float32)

    out = patch_expanding_3d(x, weight, bias, gamma, beta, up_scaling_factor=s)
    out = jax.block_until_ready(out)
    assert out.shape == (B, C_out, X * s, Y * s, Z * s), out.shape

    # The kernel intentionally streams x / W through the MXU in bf16 (perf
    # feedback); compare against the f32 reference evaluated on the same
    # bf16-rounded operands so the check isolates kernel correctness from the
    # chosen streaming precision (all accumulation / LN math is f32 in both).
    xq = x.astype(jnp.bfloat16).astype(jnp.float32)
    wq = weight.astype(jnp.bfloat16).astype(jnp.float32)
    ref = _reference(xq, wq, bias, gamma, beta, s)
    err = float(jnp.max(jnp.abs(out.astype(jnp.float32) - ref)))
    assert err < 5e-3, err
    print("KERNEL_OK")
</pallas_src>

<mosaic_0001>
module attributes {stable_mosaic.version = 11 : i64} {
  func.func @_patch_expand_kernel(%arg0: i32, %arg1: memref<32x32xbf16, #tpu.memory_space<vmem>>, %arg2: memref<32x128xbf16, #tpu.memory_space<vmem>>, %arg3: memref<1x128xf32, #tpu.memory_space<vmem>>, %arg4: memref<1x128xf32, #tpu.memory_space<vmem>>, %arg5: memref<1x128xf32, #tpu.memory_space<vmem>>, %arg6: memref<128x16xf32, #tpu.memory_space<vmem>>, %arg7: memref<16x128xf32, #tpu.memory_space<vmem>>, %arg8: memref<32x128xf32, #tpu.memory_space<vmem>>) attributes {dimension_semantics = [#tpu.dimension_semantics<parallel>], iteration_bounds = array<i64: 2>, scalar_prefetch = 0 : i64, scratch_operands = 0 : i64, tpu.core_type = #tpu.core_type<tc>, window_params = [{transform_indices = @transform_0, window_bounds = array<i64: 32, 32>}, {pipeline_mode = #tpu.pipeline_mode<synchronous>, transform_indices = @transform_1, window_bounds = array<i64: 32, 128>}, {pipeline_mode = #tpu.pipeline_mode<synchronous>, transform_indices = @transform_2, window_bounds = array<i64: 1, 128>}, {pipeline_mode = #tpu.pipeline_mode<synchronous>, transform_indices = @transform_3, window_bounds = array<i64: 1, 128>}, {pipeline_mode = #tpu.pipeline_mode<synchronous>, transform_indices = @transform_4, window_bounds = array<i64: 1, 128>}, {pipeline_mode = #tpu.pipeline_mode<synchronous>, transform_indices = @transform_5, window_bounds = array<i64: 128, 16>}, {pipeline_mode = #tpu.pipeline_mode<synchronous>, transform_indices = @transform_6, window_bounds = array<i64: 16, 128>}, {transform_indices = @transform_7, window_bounds = array<i64: 32, 128>}]} {
    %c0 = arith.constant 0 : index
    %c0_0 = arith.constant 0 : index
    %0 = vector.load %arg1[%c0, %c0_0] : memref<32x32xbf16, #tpu.memory_space<vmem>>, vector<32x32xbf16>
    %c0_1 = arith.constant 0 : index
    %c0_2 = arith.constant 0 : index
    %1 = vector.load %arg2[%c0_1, %c0_2] : memref<32x128xbf16, #tpu.memory_space<vmem>>, vector<32x128xbf16>
    %c0_3 = arith.constant 0 : index
    %c0_4 = arith.constant 0 : index
    %2 = vector.load %arg6[%c0_3, %c0_4] : memref<128x16xf32, #tpu.memory_space<vmem>>, vector<128x16xf32>
    %c0_5 = arith.constant 0 : index
    %c0_6 = arith.constant 0 : index
    %3 = vector.load %arg7[%c0_5, %c0_6] : memref<16x128xf32, #tpu.memory_space<vmem>>, vector<16x128xf32>
    %cst = arith.constant dense<0.000000e+00> : vector<32x128xf32>
    %4 = tpu.matmul %0, %1, %cst {dimension_numbers = #tpu.dot_dimension_numbers<[1], [0], [0], [1], [0, 0, 1, 1], [], []>} : vector<32x32xbf16>, vector<32x128xbf16>, vector<32x128xf32> -> vector<32x128xf32>
    %c0_7 = arith.constant 0 : index
    %c0_8 = arith.constant 0 : index
    %5 = vector.load %arg3[%c0_7, %c0_8] : memref<1x128xf32, #tpu.memory_space<vmem>>, vector<1x128xf32>
    %6 = vector.broadcast %5 : vector<1x128xf32> to vector<32x128xf32>
    %7 = arith.addf %4, %6 : vector<32x128xf32>
    %cst_9 = arith.constant dense<0.000000e+00> : vector<32x16xf32>
    %8 = tpu.matmul %7, %2, %cst_9 {dimension_numbers = #tpu.dot_dimension_numbers<[1], [0], [0], [1], [0, 0, 1, 1], [], []>} : vector<32x128xf32>, vector<128x16xf32>, vector<32x16xf32> -> vector<32x16xf32>
    %cst_10 = arith.constant dense<0.000000e+00> : vector<32x128xf32>
    %9 = tpu.matmul %8, %3, %cst_10 {dimension_numbers = #tpu.dot_dimension_numbers<[1], [0], [0], [1], [0, 0, 1, 1], [], []>} : vector<32x16xf32>, vector<16x128xf32>, vector<32x128xf32> -> vector<32x128xf32>
    %10 = arith.subf %7, %9 : vector<32x128xf32>
    %11 = arith.mulf %10, %10 : vector<32x128xf32>
    %cst_11 = arith.constant dense<0.000000e+00> : vector<32x16xf32>
    %12 = tpu.matmul %11, %2, %cst_11 {dimension_numbers = #tpu.dot_dimension_numbers<[1], [0], [0], [1], [0, 0, 1, 1], [], []>} : vector<32x128xf32>, vector<128x16xf32>, vector<32x16xf32> -> vector<32x16xf32>
    %cst_12 = arith.constant dense<0.000000e+00> : vector<32x128xf32>
    %13 = tpu.matmul %12, %3, %cst_12 {dimension_numbers = #tpu.dot_dimension_numbers<[1], [0], [0], [1], [0, 0, 1, 1], [], []>} : vector<32x16xf32>, vector<16x128xf32>, vector<32x128xf32> -> vector<32x128xf32>
    %cst_13 = arith.constant 9.99999974E-6 : f32
    %14 = vector.broadcast %cst_13 : f32 to vector<32x128xf32>
    %15 = arith.addf %13, %14 : vector<32x128xf32>
    %16 = math.rsqrt %15 : vector<32x128xf32>
    %17 = arith.mulf %10, %16 : vector<32x128xf32>
    %c0_14 = arith.constant 0 : index
    %c0_15 = arith.constant 0 : index
    %18 = vector.load %arg4[%c0_14, %c0_15] : memref<1x128xf32, #tpu.memory_space<vmem>>, vector<1x128xf32>
    %19 = vector.broadcast %18 : vector<1x128xf32> to vector<32x128xf32>
    %20 = arith.mulf %17, %19 : vector<32x128xf32>
    %c0_16 = arith.constant 0 : index
    %c0_17 = arith.constant 0 : index
    %21 = vector.load %arg5[%c0_16, %c0_17] : memref<1x128xf32, #tpu.memory_space<vmem>>, vector<1x128xf32>
    %22 = vector.broadcast %21 : vector<1x128xf32> to vector<32x128xf32>
    %23 = arith.addf %20, %22 : vector<32x128xf32>
    %c0_18 = arith.constant 0 : index
    %c0_19 = arith.constant 0 : index
    %24 = vector.load %arg8[%c0_18, %c0_19] : memref<32x128xf32, #tpu.memory_space<vmem>>, vector<32x128xf32>
    tpu.vector_store %arg8[%c0_18, %c0_19], %23 {strides = array<i32>} : memref<32x128xf32, #tpu.memory_space<vmem>>, vector<32x128xf32>,
    return
  }
  func.func @transform_0(%arg0: i32) -> (i32, i32) {
    %c0_i32 = arith.constant 0 : i32
    %c0_i32_0 = arith.constant 0 : i32
    return %arg0, %c0_i32 : i32, i32
  }
  func.func @transform_1(%arg0: i32) -> (i32, i32) {
    %c0_i32 = arith.constant 0 : i32
    %c0_i32_0 = arith.constant 0 : i32
    %c0_i32_1 = arith.constant 0 : i32
    return %c0_i32, %c0_i32_0 : i32, i32
  }
  func.func @transform_2(%arg0: i32) -> (i32, i32) {
    %c0_i32 = arith.constant 0 : i32
    %c0_i32_0 = arith.constant 0 : i32
    %c0_i32_1 = arith.constant 0 : i32
    return %c0_i32, %c0_i32_0 : i32, i32
  }
  func.func @transform_3(%arg0: i32) -> (i32, i32) {
    %c0_i32 = arith.constant 0 : i32
    %c0_i32_0 = arith.constant 0 : i32
    %c0_i32_1 = arith.constant 0 : i32
    return %c0_i32, %c0_i32_0 : i32, i32
  }
  func.func @transform_4(%arg0: i32) -> (i32, i32) {
    %c0_i32 = arith.constant 0 : i32
    %c0_i32_0 = arith.constant 0 : i32
    %c0_i32_1 = arith.constant 0 : i32
    return %c0_i32, %c0_i32_0 : i32, i32
  }
  func.func @transform_5(%arg0: i32) -> (i32, i32) {
    %c0_i32 = arith.constant 0 : i32
    %c0_i32_0 = arith.constant 0 : i32
    %c0_i32_1 = arith.constant 0 : i32
    return %c0_i32, %c0_i32_0 : i32, i32
  }
  func.func @transform_6(%arg0: i32) -> (i32, i32) {
    %c0_i32 = arith.constant 0 : i32
    %c0_i32_0 = arith.constant 0 : i32
    %c0_i32_1 = arith.constant 0 : i32
    return %c0_i32, %c0_i32_0 : i32, i32
  }
  func.func @transform_7(%arg0: i32) -> (i32, i32) {
    %c0_i32 = arith.constant 0 : i32
    %c0_i32_0 = arith.constant 0 : i32
    return %arg0, %c0_i32 : i32, i32
  }
}

</mosaic_0001>

<llo_original>
// kernel: tile.18
$region0: #{tile.18}
  #allocation0 [shape = 's32[1]{0}', space=sflag, size = 0x4, scoped, tag = 'scoped memory for tile.18']
  %s0 = inlined_call_operand.vmem [shape: f32[8], index: 0, kind: input, shape index: {}]
  %s1 = inlined_call_operand.vmem [shape: f32[16,8], index: 1, kind: output, shape index: {}]
  // Predicated region
  $region2: #{tile.18} parent=0 // pred_check
    _
  $region3: #{tile.18} parent=0 // pred_check_branch
    %3 = sbr.rel (0) target = $region5
  $region4: #{tile.18} parent=0 // pred_region
    _
  $region5: #{tile.18} parent=0 // pred_fallthru
    _
  %v4 = vld [vmem:[%s0] ss:$0 sm:$0xff]
  %5 = vst [vmem:[%s1] sm:$0xff] %v4
  %s6 = scalar_lea.vmem %s1, 8
  %7 = vst [vmem:[%s6] sm:$0xff] %v4

// kernel: tile.19
$region0: #{tile.19}
  %s0 = inlined_call_operand.vmem [shape: f32[16,8], index: 0, kind: input, shape index: {}]
  %s1 = inlined_call_operand.vmem [shape: f32[1,128], index: 1, kind: output, shape index: {}]
  $region1: #{tile.19} parent=0
    #allocation0 [shape = 'u8[4096]{0}', space=vmem, size = 0x1000, scoped, tag = 'scoped mem for output reshape']
    %v2 = vld [vmem:[%s0] sm:$0x1]
    %vm3 = vcmask 64512
    %4 = vst.msk [vmem:[#allocation0] sm:$0x1] %vm3, %v2
    %s5 = scalar_lea.vmem %s0, 15
    %v6 = vld [vmem:[%s5] sm:$0x1]
    %7 = vrot.lane.b32.xlu0 %v6, 120
    %v8 = vpop.permute.xlu0 %7
    %vm9 = vcmask 1048512
    %10 = vst.msk [vmem:[#allocation0] sm:$0x1] %vm9, %v8
    %s11 = scalar_lea.vmem %s0, 14
    %v12 = vld [vmem:[%s11] sm:$0x1]
    %13 = vrot.lane.b32.xlu0 %v12, 112
    %v14 = vpop.permute.xlu0 %13
    %vm15 = vcmask 982912
    %16 = vst.msk [vmem:[#allocation0] sm:$0x1] %vm15, %v14
    %s17 = scalar_lea.vmem %s0, 13
    %v18 = vld [vmem:[%s17] sm:$0x1]
    %19 = vrot.lane.b32.xlu0 %v18, 104
    %v20 = vpop.permute.xlu0 %19
    %vm21 = vcmask 917312
    %22 = vst.msk [vmem:[#allocation0] sm:$0x1] %vm21, %v20
    %s23 = scalar_lea.vmem %s0, 12
    %v24 = vld [vmem:[%s23] sm:$0x1]
    %25 = vrot.lane.b32.xlu0 %v24, 96
    %v26 = vpop.permute.xlu0 %25
    %vm27 = vcmask 851712
    %28 = vst.msk [vmem:[#allocation0] sm:$0x1] %vm27, %v26
    %s29 = scalar_lea.vmem %s0, 11
    %v30 = vld [vmem:[%s29] sm:$0x1]
    %31 = vrot.lane.b32.xlu0 %v30, 88
    %v32 = vpop.permute.xlu0 %31
    %vm33 = vcmask 786112
    %34 = vst.msk [vmem:[#allocation0] sm:$0x1] %vm33, %v32
    %s35 = scalar_lea.vmem %s0, 10
    %v36 = vld [vmem:[%s35] sm:$0x1]
    %37 = vrot.lane.b32.xlu0 %v36, 80
    %v38 = vpop.permute.xlu0 %37
    %vm39 = vcmask 720512
    %40 = vst.msk [vmem:[#allocation0] sm:$0x1] %vm39, %v38
    %s41 = scalar_lea.vmem %s0, 9
    %v42 = vld [vmem:[%s41] sm:$0x1]
    %43 = vrot.lane.b32.xlu0 %v42, 72
    %v44 = vpop.permute.xlu0 %43
    %vm45 = vcmask 654912
    %46 = vst.msk [vmem:[#allocation0] sm:$0x1] %vm45, %v44
    %s47 = scalar_lea.vmem %s0, 8
    %v48 = vld [vmem:[%s47] sm:$0x1]
    %49 = vrot.lane.b32.xlu0 %v48, 64
    %v50 = vpop.permute.xlu0 %49
    %vm51 = vcmask 589312
    %52 = vst.msk [vmem:[#allocation0] sm:$0x1] %vm51, %v50
    %s53 = scalar_lea.vmem %s0, 7
    %v54 = vld [vmem:[%s53] sm:$0x1]
    %55 = vrot.lane.b32.xlu0 %v54, 56
    %v56 = vpop.permute.xlu0 %55
    %vm57 = vcmask 523712
    %58 = vst.msk [vmem:[#allocation0] sm:$0x1] %vm57, %v56
    %s59 = scalar_lea.vmem %s0, 6
    %v60 = vld [vmem:[%s59] sm:$0x1]
    %61 = vrot.lane.b32.xlu0 %v60, 48
    %v62 = vpop.permute.xlu0 %61
    %vm63 = vcmask 458112
    %64 = vst.msk [vmem:[#allocation0] sm:$0x1] %vm63, %v62
    %s65 = scalar_lea.vmem %s0, 5
    %v66 = vld [vmem:[%s65] sm:$0x1]
    %67 = vrot.lane.b32.xlu0 %v66, 40
    %v68 = vpop.permute.xlu0 %67
    %vm69 = vcmask 392512
    %70 = vst.msk [vmem:[#allocation0] sm:$0x1] %vm69, %v68
    %s71 = scalar_lea.vmem %s0, 4
    %v72 = vld [vmem:[%s71] sm:$0x1]
    %73 = vrot.lane.b32.xlu0 %v72, 32
    %v74 = vpop.permute.xlu0 %73
    %vm75 = vcmask 326912
    %76 = vst.msk [vmem:[#allocation0] sm:$0x1] %vm75, %v74
    %s77 = scalar_lea.vmem %s0, 3
    %v78 = vld [vmem:[%s77] sm:$0x1]
    %79 = vrot.lane.b32.xlu0 %v78, 24
    %v80 = vpop.permute.xlu0 %79
    %vm81 = vcmask 261312
    %82 = vst.msk [vmem:[#allocation0] sm:$0x1] %vm81, %v80
    %s83 = scalar_lea.vmem %s0, 2
    %v84 = vld [vmem:[%s83] sm:$0x1]
    %85 = vrot.lane.b32.xlu0 %v84, 16
    %v86 = vpop.permute.xlu0 %85
    %vm87 = vcmask 195712
    %88 = vst.msk [vmem:[#allocation0] sm:$0x1] %vm87, %v86
    %s89 = scalar_lea.vmem %s0, 1
    %v90 = vld [vmem:[%s89] sm:$0x1]
    %91 = vrot.lane.b32.xlu0 %v90, 8
    %v92 = vpop.permute.xlu0 %91
    %vm93 = vcmask 130112
    %94 = vst.msk [vmem:[#allocation0] sm:$0x1] %vm93, %v92
    %s96 = ssub.s32 2, 1
    %v97 = vld [vmem:[#allocation0] sm:%s96]
    %s99 = ssub.s32 2, 1
    %100 = vst [vmem:[%s1] sm:%s99] %v97

// kernel: patch_expanding_3d.1
$region0: #{patch_expanding_3d.1}
  #allocation0 [shape = 'u32[]', space=smem, size = 0x4, offset = 0x4, fixed_abs, tag = 'smem constant byte address 0x4 - core index']
  #allocation1 [shape = 'u32[72,128]{1,0:T(1,128)}', space=vmem, size = 0x9000, scoped, tag = 'internal scratch']
  %s0 = inlined_call_operand.vmem [shape: bf16[64,32], index: 0, kind: input, shape index: {}]
  %s1 = inlined_call_operand.vmem [shape: bf16[32,128], index: 1, kind: input, shape index: {}]
  %s2 = inlined_call_operand.vmem [shape: f32[1,128], index: 2, kind: input, shape index: {}]
  %s3 = inlined_call_operand.vmem [shape: f32[1,128], index: 3, kind: input, shape index: {}]
  %s4 = inlined_call_operand.vmem [shape: f32[1,128], index: 4, kind: input, shape index: {}]
  %s5 = inlined_call_operand.vmem [shape: f32[128,16], index: 5, kind: input, shape index: {}]
  %s6 = inlined_call_operand.vmem [shape: f32[16,128], index: 6, kind: input, shape index: {}]
  %s7 = inlined_call_operand.vmem [shape: f32[64,128], index: 7, kind: output, shape index: {}]
  %s8 = sld [smem:[#allocation0]]
  $region61: #{patch_expanding_3d.1} parent=0
    _
  %s10 = ssub.s32 1, %s8
  %s11 = scalar_select 0, %s10, %s8
  loop: start=0, step=1, limit=4
  $region2: #{patch_expanding_3d.1} parent=0 // loop_pre_header
    _
  $region3: #{patch_expanding_3d.1} parent=0 // loop_header
    %s13 = sphi 0, %s17
    %p14 = scmp.ge.s32.totalorder %s13, 4
    %s23 = sphi 0, %s25
    %s26 = sphi 0, %s23
    %s27 = sphi 0, %s26
    %s43 = sphi 0, %s27
    %s47 = sphi 0, %s47
    %s49 = sphi 0, %s47
    %s50 = sphi 0, %s49
    %s64 = sphi 0, %s50
    %s68 = sphi 0, %s68
    %s70 = sphi 0, %s68
    %s71 = sphi 0, %s70
    %s85 = sphi 0, %s71
    %s89 = sphi 0, %s89
    %s91 = sphi 0, %s89
    %s92 = sphi 0, %s91
    %s106 = sphi 0, %s92
    %s110 = sphi 0, %s110
    %s112 = sphi 0, %s110
    %s113 = sphi 0, %s112
    %s127 = sphi 0, %s113
    %s131 = sphi 0, %s131
    %s133 = sphi 0, %s131
    %s134 = sphi 0, %s133
    %s148 = sphi 0, %s134
    %s152 = sphi 0, %s152
    %s154 = sphi 0, %s152
    %s155 = sphi 0, %s154
    %s169 = sphi 0, %s155
    %s175 = sphi 0, %s177
    %s178 = sphi 0, %s175
    %s179 = sphi 0, %s178
    %s195 = sphi 0, %s179
  $region4: #{patch_expanding_3d.1} parent=0 // loop_header_branch
    %16 = sbr.rel (%p14) target = $region8
  $region5: #{patch_expanding_3d.1} parent=0 // loop_body
    %s18 = ssub.s32 %s13, 1
    %s19 = ssub.s32 %s13, 2
    %s20 = sadd.s32 %s13, 1
    %s21 = ssub.s32 %s13, %s20
    %p22 = scmp.eq.s32.totalorder %s21, 0
    %s24 = sadd.s32 %s23, 1
    %s25 = scalar_select %p22, %s23, %s24
    %p28 = pneg %p22
    %p29 = scmp.eq.s32.totalorder %s13, 1
    %p30 = por %p28, %p29
    %p31 = scmp.ne.s32.totalorder %s23, %s26
    %p32 = scmp.eq.s32.totalorder %s13, 0
    %p33 = por %p31, %p32
    %p34 = scmp.ne.s32.totalorder %s23, %s26
    %p35 = scmp.eq.s32.totalorder %s18, 1
    %p36 = por %p34, %p35
    %p37 = scmp.ne.s32.totalorder %s26, %s27
    %p38 = scmp.eq.s32.totalorder %s18, 0
    %p39 = por %p37, %p38
    %p40 = scmp.ne.s32.totalorder %s26, %s27
    %p41 = scmp.eq.s32.totalorder %s19, 1
    %p42 = por %p40, %p41
    %p44 = scmp.ne.s32.totalorder %s27, %s43
    %p45 = scmp.eq.s32.totalorder %s19, 0
    %p46 = por %p44, %p45
    %s48 = sadd.s32 %s47, 1
    %p51 = scmp.eq.s32.totalorder %s13, 1
    %p52 = scmp.ne.s32.totalorder %s47, %s49
    %p53 = scmp.eq.s32.totalorder %s13, 0
    %p54 = por %p52, %p53
    %p55 = scmp.ne.s32.totalorder %s47, %s49
    %p56 = scmp.eq.s32.totalorder %s18, 1
    %p57 = por %p55, %p56
    %p58 = scmp.ne.s32.totalorder %s49, %s50
    %p59 = scmp.eq.s32.totalorder %s18, 0
    %p60 = por %p58, %p59
    %p61 = scmp.ne.s32.totalorder %s49, %s50
    %p62 = scmp.eq.s32.totalorder %s19, 1
    %p63 = por %p61, %p62
    %p65 = scmp.ne.s32.totalorder %s50, %s64
    %p66 = scmp.eq.s32.totalorder %s19, 0
    %p67 = por %p65, %p66
    %s69 = sadd.s32 %s68, 1
    %p72 = scmp.eq.s32.totalorder %s13, 1
    %p73 = scmp.ne.s32.totalorder %s68, %s70
    %p74 = scmp.eq.s32.totalorder %s13, 0
    %p75 = por %p73, %p74
    %p76 = scmp.ne.s32.totalorder %s68, %s70
    %p77 = scmp.eq.s32.totalorder %s18, 1
    %p78 = por %p76, %p77
    %p79 = scmp.ne.s32.totalorder %s70, %s71
    %p80 = scmp.eq.s32.totalorder %s18, 0
    %p81 = por %p79, %p80
    %p82 = scmp.ne.s32.totalorder %s70, %s71
    %p83 = scmp.eq.s32.totalorder %s19, 1
    %p84 = por %p82, %p83
    %p86 = scmp.ne.s32.totalorder %s71, %s85
    %p87 = scmp.eq.s32.totalorder %s19, 0
    %p88 = por %p86, %p87
    %s90 = sadd.s32 %s89, 1
    %p93 = scmp.eq.s32.totalorder %s13, 1
    %p94 = scmp.ne.s32.totalorder %s89, %s91
    %p95 = scmp.eq.s32.totalorder %s13, 0
    %p96 = por %p94, %p95
    %p97 = scmp.ne.s32.totalorder %s89, %s91
    %p98 = scmp.eq.s32.totalorder %s18, 1
    %p99 = por %p97, %p98
    %p100 = scmp.ne.s32.totalorder %s91, %s92
    %p101 = scmp.eq.s32.totalorder %s18, 0
    %p102 = por %p100, %p101
    %p103 = scmp.ne.s32.totalorder %s91, %s92
    %p104 = scmp.eq.s32.totalorder %s19, 1
    %p105 = por %p103, %p104
    %p107 = scmp.ne.s32.totalorder %s92, %s106
    %p108 = scmp.eq.s32.totalorder %s19, 0
    %p109 = por %p107, %p108
    %s111 = sadd.s32 %s110, 1
    %p114 = scmp.eq.s32.totalorder %s13, 1
    %p115 = scmp.ne.s32.totalorder %s110, %s112
    %p116 = scmp.eq.s32.totalorder %s13, 0
    %p117 = por %p115, %p116
    %p118 = scmp.ne.s32.totalorder %s110, %s112
    %p119 = scmp.eq.s32.totalorder %s18, 1
    %p120 = por %p118, %p119
    %p121 = scmp.ne.s32.totalorder %s112, %s113
    %p122 = scmp.eq.s32.totalorder %s18, 0
    %p123 = por %p121, %p122
    %p124 = scmp.ne.s32.totalorder %s112, %s113
    %p125 = scmp.eq.s32.totalorder %s19, 1
    %p126 = por %p124, %p125
    %p128 = scmp.ne.s32.totalorder %s113, %s127
    %p129 = scmp.eq.s32.totalorder %s19, 0
    %p130 = por %p128, %p129
    %s132 = sadd.s32 %s131, 1
    %p135 = scmp.eq.s32.totalorder %s13, 1
    %p136 = scmp.ne.s32.totalorder %s131, %s133
    %p137 = scmp.eq.s32.totalorder %s13, 0
    %p138 = por %p136, %p137
    %p139 = scmp.ne.s32.totalorder %s131, %s133
    %p140 = scmp.eq.s32.totalorder %s18, 1
    %p141 = por %p139, %p140
    %p142 = scmp.ne.s32.totalorder %s133, %s134
    %p143 = scmp.eq.s32.totalorder %s18, 0
    %p144 = por %p142, %p143
    %p145 = scmp.ne.s32.totalorder %s133, %s134
    %p146 = scmp.eq.s32.totalorder %s19, 1
    %p147 = por %p145, %p146
    %p149 = scmp.ne.s32.totalorder %s134, %s148
    %p150 = scmp.eq.s32.totalorder %s19, 0
    %p151 = por %p149, %p150
    %s153 = sadd.s32 %s152, 1
    %p156 = scmp.eq.s32.totalorder %s13, 1
    %p157 = scmp.ne.s32.totalorder %s152, %s154
    %p158 = scmp.eq.s32.totalorder %s13, 0
    %p159 = por %p157, %p158
    %p160 = scmp.ne.s32.totalorder %s152, %s154
    %p161 = scmp.eq.s32.totalorder %s18, 1
    %p162 = por %p160, %p161
    %p163 = scmp.ne.s32.totalorder %s154, %s155
    %p164 = scmp.eq.s32.totalorder %s18, 0
    %p165 = por %p163, %p164
    %p166 = scmp.ne.s32.totalorder %s154, %s155
    %p167 = scmp.eq.s32.totalorder %s19, 1
    %p168 = por %p166, %p167
    %p170 = scmp.ne.s32.totalorder %s155, %s169
    %p171 = scmp.eq.s32.totalorder %s19, 0
    %p172 = por %p170, %p171
    %s173 = ssub.s32 %s13, %s20
    %p174 = scmp.eq.s32.totalorder %s173, 0
    %s176 = sadd.s32 %s175, 1
    %s177 = scalar_select %p174, %s175, %s176
    %p180 = pneg %p174
    %p181 = scmp.eq.s32.totalorder %s13, 1
    %p182 = por %p180, %p181
    %p183 = scmp.ne.s32.totalorder %s175, %s178
    %p184 = scmp.eq.s32.totalorder %s13, 0
    %p185 = por %p183, %p184
    %p186 = scmp.ne.s32.totalorder %s175, %s178
    %p187 = scmp.eq.s32.totalorder %s18, 1
    %p188 = por %p186, %p187
    %p189 = scmp.ne.s32.totalorder %s178, %s179
    %p190 = scmp.eq.s32.totalorder %s18, 0
    %p191 = por %p189, %p190
    %p192 = scmp.ne.s32.totalorder %s178, %s179
    %p193 = scmp.eq.s32.totalorder %s19, 1
    %p194 = por %p192, %p193
    %p196 = scmp.ne.s32.totalorder %s179, %s195
    %p197 = scmp.eq.s32.totalorder %s19, 0
    %p198 = por %p196, %p197
    %p199 = scmp.le.s32.totalorder 1, %s13
    %p200 = scmp.lt.s32.totalorder %s13, 3
    %p201 = pnand %p199, %p200
    %p202 = pneg %p201
    // Predicated region
    $region9: #{patch_expanding_3d.1} parent=5 // pred_check
      _
    $region10: #{patch_expanding_3d.1} parent=5 // pred_check_branch
      %204 = sbr.rel (%p201) target = $region12
    $region11: #{patch_expanding_3d.1} parent=5 // pred_region
      %s205 = ssub.s32 %s13, 1
      // Predicated region
      $region13: #{patch_expanding_3d.1} parent=11 // pred_check
        %p206 = pneg %p60
      $region14: #{patch_expanding_3d.1} parent=11 // pred_check_branch
        %208 = sbr.rel (%p206) target = $region16
      $region15: #{patch_expanding_3d.1} parent=11 // pred_region
        _
      $region16: #{patch_expanding_3d.1} parent=11 // pred_fallthru
        _
      // Predicated region
      $region17: #{patch_expanding_3d.1} parent=11 // pred_check
        %p209 = pneg %p81
      $region18: #{patch_expanding_3d.1} parent=11 // pred_check_branch
        %211 = sbr.rel (%p209) target = $region20
      $region19: #{patch_expanding_3d.1} parent=11 // pred_region
        _
      $region20: #{patch_expanding_3d.1} parent=11 // pred_fallthru
        _
      // Predicated region
      $region21: #{patch_expanding_3d.1} parent=11 // pred_check
        %p212 = pneg %p102
      $region22: #{patch_expanding_3d.1} parent=11 // pred_check_branch
        %214 = sbr.rel (%p212) target = $region24
      $region23: #{patch_expanding_3d.1} parent=11 // pred_region
        _
      $region24: #{patch_expanding_3d.1} parent=11 // pred_fallthru
        _
      // Predicated region
      $region25: #{patch_expanding_3d.1} parent=11 // pred_check
        %p215 = pneg %p123
      $region26: #{patch_expanding_3d.1} parent=11 // pred_check_branch
        %217 = sbr.rel (%p215) target = $region28
      $region27: #{patch_expanding_3d.1} parent=11 // pred_region
        _
      $region28: #{patch_expanding_3d.1} parent=11 // pred_fallthru
        _
      // Predicated region
      $region29: #{patch_expanding_3d.1} parent=11 // pred_check
        %p218 = pneg %p144
      $region30: #{patch_expanding_3d.1} parent=11 // pred_check_branch
        %220 = sbr.rel (%p218) target = $region32
      $region31: #{patch_expanding_3d.1} parent=11 // pred_region
        _
      $region32: #{patch_expanding_3d.1} parent=11 // pred_fallthru
        _
      // Predicated region
      $region33: #{patch_expanding_3d.1} parent=11 // pred_check
        %p221 = pneg %p165
      $region34: #{patch_expanding_3d.1} parent=11 // pred_check_branch
        %223 = sbr.rel (%p221) target = $region36
      $region35: #{patch_expanding_3d.1} parent=11 // pred_region
        _
      $region36: #{patch_expanding_3d.1} parent=11 // pred_fallthru
        _
    $region12: #{patch_expanding_3d.1} parent=5 // pred_fallthru
      _
    %p224 = scmp.lt.s32.totalorder %s13, 2
    // Predicated region
    $region37: #{patch_expanding_3d.1} parent=5 // pred_check
      %p225 = pneg %p224
    $region38: #{patch_expanding_3d.1} parent=5 // pred_check_branch
      %227 = sbr.rel (%p225) target = $region40
    $region39: #{patch_expanding_3d.1} parent=5 // pred_region
      // Predicated region
      $region41: #{patch_expanding_3d.1} parent=39 // pred_check
        %p228 = pneg %p33
      $region42: #{patch_expanding_3d.1} parent=39 // pred_check_branch
        %230 = sbr.rel (%p228) target = $region44
      $region43: #{patch_expanding_3d.1} parent=39 // pred_region
        %s231 = smul.u32 4, %s13
        %p232 = scmp.lt.s32.totalorder %s231, 7
        %s233 = scalar_select %p232, %s231, 7
        %s234 = smul.addr %s233, 4
        %s235 = scalar_lea.vmem %s0, %s234
        %s236 = smul.u32 4, %s13
      $region44: #{patch_expanding_3d.1} parent=39 // pred_fallthru
        _
    $region40: #{patch_expanding_3d.1} parent=5 // pred_fallthru
      _
    %p237 = scmp.le.s32.totalorder 1, %s13
    %p238 = scmp.lt.s32.totalorder %s13, 3
    %p239 = pnand %p237, %p238
    %p240 = pneg %p239
    // Predicated region
    $region45: #{patch_expanding_3d.1} parent=5 // pred_check
      _
    $region46: #{patch_expanding_3d.1} parent=5 // pred_check_branch
      %242 = sbr.rel (%p239) target = $region48
    $region47: #{patch_expanding_3d.1} parent=5 // pred_region
      %s243 = ssub.s32 %s13, 1
      %s244 = smul.u32 4, %s18
      %p245 = scmp.lt.s32.totalorder %s244, 7
      %s246 = scalar_select %p245, %s244, 7
      %s247 = smul.addr %s246, 4
      %s248 = scalar_lea.vmem %s0, %s247
      %p249 = pneg %p39
      %p250 = pneg %p36
      %p251 = pneg %p60
      %p252 = pneg %p57
      %p253 = pneg %p81
      %p254 = pneg %p78
      %p255 = pneg %p102
      %p256 = pneg %p99
      %p257 = pneg %p123
      %p258 = pneg %p120
      %p259 = pneg %p144
      %p260 = pneg %p141
      %p261 = pneg %p165
      %p262 = pneg %p162
      %p263 = pneg %p191
      %p264 = pneg %p188
      %s265 = smul.u32 4, %s18
      %p266 = scmp.lt.s32.totalorder %s265, 7
      %s267 = scalar_select %p266, %s265, 7
      %s268 = smul.addr %s267, 8
      %s269 = scalar_lea.vmem %s7, %s268
      %s270 = smul.u32 4, %s18
      %p271 = scmp.lt.s32.totalorder %s270, 7
      %s272 = scalar_select %p271, %s270, 7
      %s273 = smul.addr %s272, 4
      %s274 = scalar_lea.vmem %s0, %s273
      %s275 = smul.u32 4, %s18
      %s276 = smul.u32 4, %s18
      %p277 = scmp.lt.s32.totalorder %s276, 7
      %s278 = scalar_select %p277, %s276, 7
      %s279 = smul.addr %s278, 8
      %s280 = scalar_lea.vmem %s7, %s279
      %s281 = smul.u32 4, %s18
      %v283 = vld [vmem:[%s274] sm:$0xf]
      %v284 = vld [vmem:[%s274 + $0x4] sm:$0xf]
      %v285 = vld [vmem:[%s274 + $0x8] sm:$0xf]
      %v286 = vld [vmem:[%s274 + $0xc] sm:$0xf]
      %v287 = vld [vmem:[%s1] sm:$0xf]
      %v288 = vld [vmem:[%s1 + $0x4] sm:$0xf]
      %v289 = vld [vmem:[%s1 + $0x8] sm:$0xf]
      %v290 = vld [vmem:[%s1 + $0xc] sm:$0xf]
      %v291 = vld [vmem:[%s5] sm:$0xff]
      %v292 = vld [vmem:[%s5 + $0x8] sm:$0xff]
      %v293 = vld [vmem:[%s5 + $0x10] sm:$0xff]
      %v294 = vld [vmem:[%s5 + $0x18] sm:$0xff]
      %v295 = vld [vmem:[%s5 + $0x20] sm:$0xff]
      %v296 = vld [vmem:[%s5 + $0x28] sm:$0xff]
      %v297 = vld [vmem:[%s5 + $0x30] sm:$0xff]
      %v298 = vld [vmem:[%s5 + $0x38] sm:$0xff]
      %v299 = vld [vmem:[%s5 + $0x40] sm:$0xff]
      %v300 = vld [vmem:[%s5 + $0x48] sm:$0xff]
      %v301 = vld [vmem:[%s5 + $0x50] sm:$0xff]
      %v302 = vld [vmem:[%s5 + $0x58] sm:$0xff]
      %v303 = vld [vmem:[%s5 + $0x60] sm:$0xff]
      %v304 = vld [vmem:[%s5 + $0x68] sm:$0xff]
      %v305 = vld [vmem:[%s5 + $0x70] sm:$0xff]
      %v306 = vld [vmem:[%s5 + $0x78] sm:$0xff]
      %v307 = vld [vmem:[%s6] sm:$0xff]
      %v308 = vld [vmem:[%s6 + $0x8] sm:$0xff]
      %v309 = vld [vmem:[%s2] sm:$0x1]
      %v311 = vperm.slane %v309, 0
      %v317 = vunpack.c.l.b16 %v283
      %v318 = vunpack.c.l.b16 %v284
      %v319 = vunpack.c.l.b16 %v285
      %v320 = vunpack.c.l.b16 %v286
      %v321 = vpack.c.b16 %v318, %v317
      %v322 = vpack.c.b16 %v320, %v319
      %v327 = vunpack.c.l.b16 %v287
      %v328 = vunpack.c.l.b16 %v288
      %v329 = vunpack.c.l.b16 %v289
      %v330 = vunpack.c.l.b16 %v290
      %v331 = vpack.c.b16 %v328, %v327
      %v332 = vpack.c.b16 %v330, %v329
      %vm335 = vcmask 261120
      %v337 = vsel %vm335, %v321, 0
      %v340 = vsel %vm335, %v322, 0
      %342 = vmatpush.bf16.msra.mxu0 0
      %343 = vmatpush.bf16.msra.mxu0 0
      %344 = vmatpush.bf16.msra.mxu0 0
      %345 = vmatpush.bf16.msra.mxu0 0
      %346 = vmatpush.bf16.msra.mxu0 0
      %347 = vmatpush.bf16.msra.mxu0 0
      %348 = vmatpush.bf16.msra.mxu0 %v332
      %349 = vmatpush.bf16.msra.mxu0 %v331
      %350 = vmatmul.bf16.gmra.mxu0 %v337
      %v351 = vpop.f32.mrf.mxu0
      %v352 = vadd.f32 %v311, %v351
      %v353 = vpop.f32.mrf.mxu0
      %v354 = vadd.f32 %v311, %v353
      %355 = vmatmul.bf16.gmra.mxu0 %v340
      %v356 = vpop.f32.mrf.mxu0
      %v357 = vadd.f32 %v311, %v356
      %v358 = vpop.f32.mrf.mxu0
      %v359 = vadd.f32 %v311, %v358
      %360 = vdwg.mxu0
      %361 = vmatpush.msra.mxu0 %v306
      %362 = vmatpush.msra.mxu0 %v305
      %363 = vmatpush.msra.mxu0 %v304
      %364 = vmatpush.msra.mxu0 %v303
      %365 = vmatpush.msra.mxu0 %v302
      %366 = vmatpush.msra.mxu0 %v301
      %367 = vmatpush.msra.mxu0 %v300
      %368 = vmatpush.msra.mxu0 %v299
      %369 = vmatpush.msra.mxu0 %v298
      %370 = vmatpush.msra.mxu0 %v297
      %371 = vmatpush.msra.mxu0 %v296
      %372 = vmatpush.msra.mxu0 %v295
      %373 = vmatpush.msra.mxu0 %v294
      %374 = vmatpush.msra.mxu0 %v293
      %375 = vmatpush.msra.mxu0 %v292
      %376 = vmatpush.msra.mxu0 %v291
      %377 = vmatmul.f32.gmra.mxu0 %v352
      %v378 = vpop.f32.mrf.mxu0
      %v379 = vadd.f32 0.0, %v378
      %380 = vmatmul.f32.gmra.mxu0 %v354
      %v381 = vpop.f32.mrf.mxu0
      %v382 = vadd.f32 0.0, %v381
      %383 = vmatmul.f32.gmra.mxu0 %v357
      %v384 = vpop.f32.mrf.mxu0
      %v385 = vadd.f32 0.0, %v384
      %386 = vmatmul.f32.gmra.mxu0 %v359
      %v387 = vpop.f32.mrf.mxu0
      %v388 = vadd.f32 0.0, %v387
      %389 = vdwg.mxu0
      %vm390 = vcmask 130048
      %v392 = vsel %vm390, %v379, 0
      %v395 = vsel %vm390, %v382, 0
      %v398 = vsel %vm390, %v385, 0
      %v401 = vsel %vm390, %v388, 0
      %403 = vmatpush.msra.mxu0 0.0
      %404 = vmatpush.msra.mxu0 0.0
      %405 = vmatpush.msra.mxu0 0.0
      %406 = vmatpush.msra.mxu0 0.0
      %407 = vmatpush.msra.mxu0 0.0
      %408 = vmatpush.msra.mxu0 0.0
      %409 = vmatpush.msra.mxu0 0.0
      %410 = vmatpush.msra.mxu0 0.0
      %411 = vmatpush.msra.mxu0 0.0
      %412 = vmatpush.msra.mxu0 0.0
      %413 = vmatpush.msra.mxu0 0.0
      %414 = vmatpush.msra.mxu0 0.0
      %415 = vmatpush.msra.mxu0 0.0
      %416 = vmatpush.msra.mxu0 0.0
      %417 = vmatpush.msra.mxu0 %v308
      %418 = vmatpush.msra.mxu0 %v307
      %419 = vmatmul.f32.gmra.mxu0 %v392
      %v420 = vpop.f32.mrf.mxu0
      %v421 = vadd.f32 0.0, %v420
      %422 = vmatmul.f32.gmra.mxu0 %v395
      %v423 = vpop.f32.mrf.mxu0
      %v424 = vadd.f32 0.0, %v423
      %425 = vmatmul.f32.gmra.mxu0 %v398
      %v426 = vpop.f32.mrf.mxu0
      %v427 = vadd.f32 0.0, %v426
      %428 = vmatmul.f32.gmra.mxu0 %v401
      %v429 = vpop.f32.mrf.mxu0
      %v430 = vadd.f32 0.0, %v429
      %431 = vdwg.mxu0
      %v432 = vsub.f32 %v352, %v421
      %v433 = vsub.f32 %v354, %v424
      %v434 = vsub.f32 %v357, %v427
      %v435 = vsub.f32 %v359, %v430
      %v436 = vmul.f32 %v432, %v432
      %v437 = vmul.f32 %v433, %v433
      %v438 = vmul.f32 %v434, %v434
      %v439 = vmul.f32 %v435, %v435
      %440 = vmatpush.msra.mxu0 %v306
      %441 = vmatpush.msra.mxu0 %v305
      %442 = vmatpush.msra.mxu0 %v304
      %443 = vmatpush.msra.mxu0 %v303
      %444 = vmatpush.msra.mxu0 %v302
      %445 = vmatpush.msra.mxu0 %v301
      %446 = vmatpush.msra.mxu0 %v300
      %447 = vmatpush.msra.mxu0 %v299
      %448 = vmatpush.msra.mxu0 %v298
      %449 = vmatpush.msra.mxu0 %v297
      %450 = vmatpush.msra.mxu0 %v296
      %451 = vmatpush.msra.mxu0 %v295
      %452 = vmatpush.msra.mxu0 %v294
      %453 = vmatpush.msra.mxu0 %v293
      %454 = vmatpush.msra.mxu0 %v292
      %455 = vmatpush.msra.mxu0 %v291
      %456 = vmatmul.f32.gmra.mxu0 %v436
      %v457 = vpop.f32.mrf.mxu0
      %v458 = vadd.f32 0.0, %v457
      %459 = vmatmul.f32.gmra.mxu0 %v437
      %v460 = vpop.f32.mrf.mxu0
      %v461 = vadd.f32 0.0, %v460
      %462 = vmatmul.f32.gmra.mxu0 %v438
      %v463 = vpop.f32.mrf.mxu0
      %v464 = vadd.f32 0.0, %v463
      %465 = vmatmul.f32.gmra.mxu0 %v439
      %v466 = vpop.f32.mrf.mxu0
      %v467 = vadd.f32 0.0, %v466
      %468 = vdwg.mxu0
      %v470 = vsel %vm390, %v458, 0
      %v473 = vsel %vm390, %v461, 0
      %v476 = vsel %vm390, %v464, 0
      %v479 = vsel %vm390, %v467, 0
      %481 = vmatpush.msra.mxu0 0.0
      %482 = vmatpush.msra.mxu0 0.0
      %483 = vmatpush.msra.mxu0 0.0
      %484 = vmatpush.msra.mxu0 0.0
      %485 = vmatpush.msra.mxu0 0.0
      %486 = vmatpush.msra.mxu0 0.0
      %487 = vmatpush.msra.mxu0 0.0
      %488 = vmatpush.msra.mxu0 0.0
      %489 = vmatpush.msra.mxu0 0.0
      %490 = vmatpush.msra.mxu0 0.0
      %491 = vmatpush.msra.mxu0 0.0
      %492 = vmatpush.msra.mxu0 0.0
      %493 = vmatpush.msra.mxu0 0.0
      %494 = vmatpush.msra.mxu0 0.0
      %495 = vmatpush.msra.mxu0 %v308
      %496 = vmatpush.msra.mxu0 %v307
      %497 = vmatmul.f32.gmra.mxu0 %v470
      %v498 = vpop.f32.mrf.mxu0
      %v499 = vadd.f32 1e-05, %v498
      %500 = vmatmul.f32.gmra.mxu0 %v473
      %v501 = vpop.f32.mrf.mxu0
      %v502 = vadd.f32 1e-05, %v501
      %503 = vmatmul.f32.gmra.mxu0 %v476
      %v504 = vpop.f32.mrf.mxu0
      %v505 = vadd.f32 1e-05, %v504
      %506 = vmatmul.f32.gmra.mxu0 %v479
      %v507 = vpop.f32.mrf.mxu0
      %v508 = vadd.f32 1e-05, %v507
      %509 = vdwg.mxu0
      %v510 = vrsqrt.pop %v499
      %v511 = vmul.f32 %v510, %v499
      %v512 = vmul.f32 %v511, %v510
      %v513 = vmul.f32 0.5, %v512
      %v514 = vsub.f32 1.5, %v513
      %v515 = vmul.f32 %v510, %v514
      %vm516 = vweird.f32 %v499
      %vm517 = vweird.f32 %v510
      %vm518 = vmor %vm516, %vm517
      %v519 = vsel %vm518, %v510, %v515
      %v520 = vrsqrt.pop %v502
      %v521 = vmul.f32 %v520, %v502
      %v522 = vmul.f32 %v521, %v520
      %v523 = vmul.f32 0.5, %v522
      %v524 = vsub.f32 1.5, %v523
      %v525 = vmul.f32 %v520, %v524
      %vm526 = vweird.f32 %v502
      %vm527 = vweird.f32 %v520
      %vm528 = vmor %vm526, %vm527
      %v529 = vsel %vm528, %v520, %v525
      %v530 = vrsqrt.pop %v505
      %v531 = vmul.f32 %v530, %v505
      %v532 = vmul.f32 %v531, %v530
      %v533 = vmul.f32 0.5, %v532
      %v534 = vsub.f32 1.5, %v533
      %v535 = vmul.f32 %v530, %v534
      %vm536 = vweird.f32 %v505
      %vm537 = vweird.f32 %v530
      %vm538 = vmor %vm536, %vm537
      %v539 = vsel %vm538, %v530, %v535
      %v540 = vrsqrt.pop %v508
      %v541 = vmul.f32 %v540, %v508
      %v542 = vmul.f32 %v541, %v540
      %v543 = vmul.f32 0.5, %v542
      %v544 = vsub.f32 1.5, %v543
      %v545 = vmul.f32 %v540, %v544
      %vm546 = vweird.f32 %v508
      %vm547 = vweird.f32 %v540
      %vm548 = vmor %vm546, %vm547
      %v549 = vsel %vm548, %v540, %v545
      %v550 = vmul.f32 %v432, %v519
      %v551 = vmul.f32 %v433, %v529
      %v552 = vmul.f32 %v434, %v539
      %v553 = vmul.f32 %v435, %v549
      %v554 = vld [vmem:[%s3] sm:$0x1]
      %v556 = vperm.slane %v554, 0
      %v558 = vmul.f32 %v550, %v556
      %v559 = vmul.f32 %v551, %v556
      %v560 = vmul.f32 %v552, %v556
      %v561 = vmul.f32 %v553, %v556
      %v562 = vld [vmem:[%s4] sm:$0x1]
      %v564 = vperm.slane %v562, 0
      %v566 = vadd.f32 %v558, %v564
      %v567 = vadd.f32 %v559, %v564
      %v568 = vadd.f32 %v560, %v564
      %v569 = vadd.f32 %v561, %v564
      %570 = vst [vmem:[%s280] sm:$0xff] %v566
      %571 = vst [vmem:[%s280 + $0x8] sm:$0xff] %v567
      %572 = vst [vmem:[%s280 + $0x10] sm:$0xff] %v568
      %573 = vst [vmem:[%s280 + $0x18] sm:$0xff] %v569
      %s574 = smul.u32 4, %s18
      %p575 = scmp.lt.s32.totalorder %s574, 7
      %s576 = scalar_select %p575, %s574, 7
      %s577 = smul.addr %s576, 8
      %s578 = scalar_lea.vmem %s7, %s577
      // Predicated region
      $region49: #{patch_expanding_3d.1} parent=47 // pred_check
        %p579 = pneg %p188
      $region50: #{patch_expanding_3d.1} parent=47 // pred_check_branch
        %581 = sbr.rel (%p579) target = $region52
      $region51: #{patch_expanding_3d.1} parent=47 // pred_region
        %s582 = smul.u32 4, %s18
      $region52: #{patch_expanding_3d.1} parent=47 // pred_fallthru
        _
    $region48: #{patch_expanding_3d.1} parent=5 // pred_fallthru
      _
    %p583 = scmp.le.s32.totalorder 2, %s13
    // Predicated region
    $region53: #{patch_expanding_3d.1} parent=5 // pred_check
      %p584 = pneg %p583
    $region54: #{patch_expanding_3d.1} parent=5 // pred_check_branch
      %586 = sbr.rel (%p584) target = $region56
    $region55: #{patch_expanding_3d.1} parent=5 // pred_region
      %s587 = ssub.s32 %s13, 2
      // Predicated region
      $region57: #{patch_expanding_3d.1} parent=55 // pred_check
        %p588 = pneg %p194
      $region58: #{patch_expanding_3d.1} parent=55 // pred_check_branch
        %590 = sbr.rel (%p588) target = $region60
      $region59: #{patch_expanding_3d.1} parent=55 // pred_region
        %s591 = smul.u32 4, %s19
        %p592 = scmp.lt.s32.totalorder %s591, 7
        %s593 = scalar_select %p592, %s591, 7
        %s594 = smul.addr %s593, 8
        %s595 = scalar_lea.vmem %s7, %s594
      $region60: #{patch_expanding_3d.1} parent=55 // pred_fallthru
        _
    $region56: #{patch_expanding_3d.1} parent=5 // pred_fallthru
      _
  $region6: #{patch_expanding_3d.1} parent=0 // loop_footer
    %s17 = sadd.s32 1, %s13
  $region7: #{patch_expanding_3d.1} parent=0 // loop_footer_branch
    %12 = sbr.rel target = $region3
  $region8: #{patch_expanding_3d.1} parent=0 // loop_exit
    _

</llo_original>
